<compile_context>
chip_gen: v7x
topology: tpu7x:2x2x1
jax: 0.10.0
libtpu: 0.0.40
codegen_flags: <defaults>
</compile_context>

<pallas_src>
import math

import jax
import jax.numpy as jnp
from jax.experimental import pallas as pl
from jax.experimental.pallas import tpu as pltpu

WORLD_SIZE = 4  # ranks [0, 1, 2, 3]


def _round_up(x, m):
    return ((x + m - 1) // m) * m


def _sublane_tile(itemsize):
    # sub-32-bit dtypes pack along sublanes: f32 -> 8, bf16 -> 16, int8/fp8 -> 32
    return {4: 8, 2: 16, 1: 32}.get(itemsize, 8)


def _chip_kind() -> str:
    try:
        return jax.devices()[0].device_kind.lower()
    except Exception:  # pragma: no cover - defensive
        return ""


def _gen_params():
    """(target_in_block_bytes, vmem_cap_bytes, is_v7x) per TPU generation."""
    kind = _chip_kind()
    if "v7" in kind:
        # 64 MiB VMEM per TC, ~3.2 TB/s HBM: bigger blocks, but stay <= ~48 MiB.
        return (12 << 20), (48 << 20), True
    if "v6" in kind:
        # 128 MiB VMEM, ~1.4 TB/s HBM.
        return (16 << 20), (100 << 20), False
    if "v5" in kind:
        # ~0.82 TB/s HBM: 4 MiB blocks already <6% step overhead.
        return (4 << 20), (100 << 20), False
    # Unknown chip: conservative.
    return (4 << 20), (32 << 20), False


def _tree_sum_cast(parts, out_dtype):
    """Pairwise tree-sum of the 4 per-rank arrays, f32 accumulation for floats."""
    acc_dt = jnp.float32 if jnp.issubdtype(out_dtype, jnp.floating) else out_dtype
    s01 = parts[0].astype(acc_dt) + parts[1].astype(acc_dt)
    s23 = parts[2].astype(acc_dt) + parts[3].astype(acc_dt)
    return (s01 + s23).astype(out_dtype)


def _allreduce_sum_kernel(x_ref, o_ref):
    # x_ref: [WORLD_SIZE, tile_rows, lane_w] -> o_ref: [tile_rows, lane_w]
    # Pairwise tree-sum; avoids materializing an upcast copy of the whole
    # [4, tile_rows, lane_w] block (matters for bf16 at large tiles).
    acc_dt = jnp.float32 if jnp.issubdtype(o_ref.dtype, jnp.floating) else o_ref.dtype
    s01 = x_ref[0].astype(acc_dt) + x_ref[1].astype(acc_dt)
    s23 = x_ref[2].astype(acc_dt) + x_ref[3].astype(acc_dt)
    o_ref[...] = (s01 + s23).astype(o_ref.dtype)


def all_reduce_sum(x_per_rank: jax.Array) -> jax.Array:
    """x_per_rank: [WORLD_SIZE, *rank_shape] -> all-reduced tensor [*rank_shape]."""
    assert x_per_rank.shape[0] == WORLD_SIZE
    rank_shape = x_per_rank.shape[1:]
    dtype = x_per_rank.dtype
    itemsize = jnp.dtype(dtype).itemsize
    sub = _sublane_tile(itemsize)

    n_elem = math.prod(rank_shape) if rank_shape else 1

    # Widest lane-dense slab whose (lane_w * sublane_tile) atom tiles n_elem
    # exactly; otherwise use 128 lanes and reduce the small tail outside the
    # kernel (NO whole-array padding pass).
    lane_w = 128
    for cand in (2048, 1024, 512, 256, 128):
        if n_elem % (cand * sub) == 0:
            lane_w = cand
            break

    atom = lane_w * sub
    n_main = (n_elem // atom) * atom
    tail = n_elem - n_main

    flat = x_per_rank.reshape(WORLD_SIZE, n_elem)

    if n_main == 0:
        # Tiny input (< one 8x128 tile of work): no point launching a kernel.
        return _tree_sum_cast([flat[r] for r in range(WORLD_SIZE)], dtype).reshape(
            rank_shape
        )

    rows = n_main // lane_w  # multiple of `sub`
    target_in_bytes, vmem_cap, is_v7x = _gen_params()

    # Tile rows: target the generation-specific input-block size.
    per_row_in_bytes = WORLD_SIZE * lane_w * itemsize
    tile_hi = max(sub, (target_in_bytes // per_row_in_bytes) // sub * sub)
    tile_rows = min(rows, tile_hi)
    if is_v7x and rows >= 2 * sub:
        # Force grid >= 2 so both v7x TensorCores stream (parallel semantics).
        tile_rows = min(tile_rows, _round_up(pl.cdiv(rows, 2), sub))
    grid = (pl.cdiv(rows, tile_rows),)

    # Explicit VMEM budget: double-buffered in + out blocks, plus the f32
    # intermediates (s01, s23) the kernel materializes, plus headroom.
    in_block = WORLD_SIZE * tile_rows * lane_w * itemsize
    out_block = tile_rows * lane_w * itemsize
    f32_inter = 2 * tile_rows * lane_w * 4
    vmem_limit = min(2 * (in_block + out_block) + f32_inter + (4 << 20), vmem_cap)

    main = flat[:, :n_main] if tail else flat
    x3d = main.reshape(WORLD_SIZE, rows, lane_w)

    out2d = pl.pallas_call(
        _allreduce_sum_kernel,
        out_shape=jax.ShapeDtypeStruct((rows, lane_w), dtype),
        grid_spec=pltpu.PrefetchScalarGridSpec(
            num_scalar_prefetch=0,
            grid=grid,
            in_specs=[
                pl.BlockSpec((WORLD_SIZE, tile_rows, lane_w), lambda i: (0, i, 0)),
            ],
            out_specs=pl.BlockSpec((tile_rows, lane_w), lambda i: (i, 0)),
        ),
        compiler_params=pltpu.CompilerParams(
            dimension_semantics=("parallel",),
            vmem_limit_bytes=vmem_limit,
        ),
        cost_estimate=pl.CostEstimate(
            flops=3 * n_main,
            transcendentals=0,
            bytes_accessed=5 * n_main * itemsize,
        ),
    )(x3d)

    out_flat = out2d.reshape(-1)
    if tail:
        # Tail is < lane_w * sub elements: O(atom) plain-JAX reduce, not O(n).
        tail_out = _tree_sum_cast([flat[r, n_main:] for r in range(WORLD_SIZE)], dtype)
        out_flat = jnp.concatenate([out_flat, tail_out])
    return out_flat.reshape(rank_shape)


if __name__ == "__main__":
    key = jax.random.PRNGKey(0)
    # Small NCHW input per rank: B=2, C=4, H=16, W=16; 4 ranks' worth stacked.
    x_per_rank = jax.random.normal(
        key, (WORLD_SIZE, 2, 4, 16, 16), dtype=jnp.float32
    )

    out = jax.block_until_ready(all_reduce_sum(x_per_rank))

    # Reference: plain-JAX sum over the rank axis.
    ref = jnp.sum(x_per_rank, axis=0)
    assert out.shape == ref.shape and out.dtype == ref.dtype
    assert jnp.allclose(out, ref, atol=1e-5, rtol=1e-5)

    print("KERNEL_OK")
</pallas_src>

<mosaic_0001>
module attributes {stable_mosaic.version = 11 : i64} {
  func.func @_allreduce_sum_kernel(%arg0: i32, %arg1: memref<4x8x256xf32, #tpu.memory_space<vmem>>, %arg2: memref<8x256xf32, #tpu.memory_space<vmem>>) attributes {dimension_semantics = [#tpu.dimension_semantics<parallel>], iteration_bounds = array<i64: 1>, scalar_prefetch = 0 : i64, scratch_operands = 0 : i64, tpu.core_type = #tpu.core_type<tc>, window_params = [{transform_indices = @transform_0, window_bounds = array<i64: 4, 8, 256>}, {transform_indices = @transform_1, window_bounds = array<i64: 8, 256>}]} {
    %c0 = arith.constant 0 : index
    %c0_0 = arith.constant 0 : index
    %c0_1 = arith.constant 0 : index
    %0 = vector.load %arg1[%c0, %c0_0, %c0_1] : memref<4x8x256xf32, #tpu.memory_space<vmem>>, vector<1x8x256xf32>
    %1 = vector.shape_cast %0 : vector<1x8x256xf32> to vector<8x256xf32>
    %c1 = arith.constant 1 : index
    %c0_2 = arith.constant 0 : index
    %c0_3 = arith.constant 0 : index
    %2 = vector.load %arg1[%c1, %c0_2, %c0_3] : memref<4x8x256xf32, #tpu.memory_space<vmem>>, vector<1x8x256xf32>
    %3 = vector.shape_cast %2 : vector<1x8x256xf32> to vector<8x256xf32>
    %4 = arith.addf %1, %3 : vector<8x256xf32>
    %c2 = arith.constant 2 : index
    %c0_4 = arith.constant 0 : index
    %c0_5 = arith.constant 0 : index
    %5 = vector.load %arg1[%c2, %c0_4, %c0_5] : memref<4x8x256xf32, #tpu.memory_space<vmem>>, vector<1x8x256xf32>
    %6 = vector.shape_cast %5 : vector<1x8x256xf32> to vector<8x256xf32>
    %c3 = arith.constant 3 : index
    %c0_6 = arith.constant 0 : index
    %c0_7 = arith.constant 0 : index
    %7 = vector.load %arg1[%c3, %c0_6, %c0_7] : memref<4x8x256xf32, #tpu.memory_space<vmem>>, vector<1x8x256xf32>
    %8 = vector.shape_cast %7 : vector<1x8x256xf32> to vector<8x256xf32>
    %9 = arith.addf %6, %8 : vector<8x256xf32>
    %10 = arith.addf %4, %9 : vector<8x256xf32>
    %c0_8 = arith.constant 0 : index
    %c0_9 = arith.constant 0 : index
    %11 = vector.load %arg2[%c0_8, %c0_9] : memref<8x256xf32, #tpu.memory_space<vmem>>, vector<8x256xf32>
    tpu.vector_store %arg2[%c0_8, %c0_9], %10 {strides = array<i32>} : memref<8x256xf32, #tpu.memory_space<vmem>>, vector<8x256xf32>,
    return
  }
  func.func @transform_0(%arg0: i32) -> (i32, i32, i32) {
    %c0_i32 = arith.constant 0 : i32
    %c0_i32_0 = arith.constant 0 : i32
    %c0_i32_1 = arith.constant 0 : i32
    return %c0_i32, %arg0, %c0_i32_0 : i32, i32, i32
  }
  func.func @transform_1(%arg0: i32) -> (i32, i32) {
    %c0_i32 = arith.constant 0 : i32
    %c0_i32_0 = arith.constant 0 : i32
    return %arg0, %c0_i32 : i32, i32
  }
}

</mosaic_0001>

<llo_original>
// kernel: tpu_custom_call.1
$region0: #{tpu_custom_call.1}
  #allocation0 [shape = 'u32[]', space=smem, size = 0x4, offset = 0x4, fixed_abs, tag = 'smem constant byte address 0x4 - core index']
  #allocation1 [shape = 'u32[144,128]{1,0:T(1,128)}', space=vmem, size = 0x12000, scoped, tag = 'internal scratch']
  %s0 = inlined_call_operand.hbm [shape: f32[4,8,256], index: 0, kind: input, shape index: {}]
  %s1 = inlined_call_operand.hbm [shape: f32[8,256], index: 1, kind: output, shape index: {}]
  %s2 = sld [smem:[#allocation0]]
  $region18: #{tpu_custom_call.1} parent=0
    _
  %s4 = ssub.s32 1, %s2
  %s5 = scalar_select 0, %s4, %s2
  $region1: #{tpu_custom_call.1} parent=0
    #allocation2 [shape = 'u8[32768]{0}', space=vmem, size = 0x8000, scoped, tag = 'input window, operand 0, single buffered']
    #allocation3 [shape = 's32[1]{0}', space=sflag, size = 0x4, scoped, tag = 'scoped memory for tpu_custom_call.1']
    #allocation4 [shape = 's32[1]{0}', space=sflag, size = 0x4, scoped, tag = 'scoped memory for tpu_custom_call.1']
    #allocation5 [shape = 'u8[8192]{0}', space=vmem, size = 0x2000, scoped, tag = 'output window, operand 0, single buffered']
    %6 = vsyncpa [#allocation3], 0
    %7 = vsyncpa [#allocation4], 0
    // Predicated region
    $region2: #{tpu_custom_call.1} parent=1 // pred_check
      _
    $region3: #{tpu_custom_call.1} parent=1 // pred_check_branch
      %9 = sbr.rel (0) target = $region5
    $region4: #{tpu_custom_call.1} parent=1 // pred_region
      %s11 = ssub.s32 1024, 1024
      %12 = vsyncadd [#allocation3], %s11
      %s13 = sshll.u32 [#allocation2], 4
      %s14 = int_to_ptr.vmem [resolvable:$true] %s13
      %19 = dma.hbm_to_vmem [thread:$0]  %s0, 1024, %s14, [#allocation3], 256, 256, 16
    $region5: #{tpu_custom_call.1} parent=1 // pred_fallthru
      _
    // Predicated region
    $region6: #{tpu_custom_call.1} parent=1 // pred_check
      _
    $region7: #{tpu_custom_call.1} parent=1 // pred_check_branch
      %21 = sbr.rel (0) target = $region9
    $region8: #{tpu_custom_call.1} parent=1 // pred_region
      %22 = dma.done [#allocation3], 1024
    $region9: #{tpu_custom_call.1} parent=1 // pred_fallthru
      _
    %v23 = vld [vmem:[#allocation2] sm:$0xff]
    %v24 = vld [vmem:[#allocation2 + $0x8] sm:$0xff]
    %s25 = scalar_lea.vmem [#allocation2], 16
    %v26 = vld [vmem:[%s25] sm:$0xff]
    %v27 = vld [vmem:[%s25 + $0x8] sm:$0xff]
    %v28 = vadd.f32 %v23, %v26
    %v29 = vadd.f32 %v24, %v27
    %s30 = scalar_lea.vmem [#allocation2], 32
    %v31 = vld [vmem:[%s30] sm:$0xff]
    %v32 = vld [vmem:[%s30 + $0x8] sm:$0xff]
    %s33 = scalar_lea.vmem [#allocation2], 48
    %v34 = vld [vmem:[%s33] sm:$0xff]
    %v35 = vld [vmem:[%s33 + $0x8] sm:$0xff]
    %v36 = vadd.f32 %v31, %v34
    %v37 = vadd.f32 %v32, %v35
    %v38 = vadd.f32 %v28, %v36
    %v39 = vadd.f32 %v29, %v37
    %40 = vst [vmem:[#allocation5] sm:$0xff] %v38
    %41 = vst [vmem:[#allocation5 + $0x8] sm:$0xff] %v39
    // Predicated region
    $region10: #{tpu_custom_call.1} parent=1 // pred_check
      _
    $region11: #{tpu_custom_call.1} parent=1 // pred_check_branch
      %43 = sbr.rel (0) target = $region13
    $region12: #{tpu_custom_call.1} parent=1 // pred_region
      %s45 = ssub.s32 256, 256
      %46 = vsyncadd [#allocation4], %s45
      %s48 = sshll.u32 [#allocation5], 4
      %s49 = int_to_ptr.vmem [resolvable:$true] %s48
      %51 = dma.vmem_to_hbm [thread:$0]  %s49, 256, %s1, [#allocation4]
    $region13: #{tpu_custom_call.1} parent=1 // pred_fallthru
      _
    // Predicated region
    $region14: #{tpu_custom_call.1} parent=1 // pred_check
      _
    $region15: #{tpu_custom_call.1} parent=1 // pred_check_branch
      %53 = sbr.rel (0) target = $region17
    $region16: #{tpu_custom_call.1} parent=1 // pred_region
      %54 = dma.done [#allocation4], 256
    $region17: #{tpu_custom_call.1} parent=1 // pred_fallthru
      _
    %55 = vsyncpa [#allocation3], 1
    %56 = vsyncpa [#allocation4], 1

</llo_original>
